<compile_context>
chip_gen: v6e
topology: v6e:2x2x1
jax: 0.10.0
libtpu: 0.0.40
codegen_flags: <defaults>
</compile_context>

<pallas_src>
import jax
import jax.numpy as jnp
from jax.experimental import pallas as pl
from jax.experimental.pallas import tpu as pltpu

_LANES = 128
_MAX_TS = 1024        # rows of 128 lanes per tile (1024 x 128 f32 = 512 KiB per channel plane)
_MIN_TS = 256         # keep per-step traffic >= ~1 MiB (per-step overhead < ~1%)
_TARGET_STEPS = 4     # aim for >= 4 total grid steps (v7x megacore + pipelining)
_MAX_TILE_BYTES = 2 << 20   # cap on the RGBA input tile in the misaligned (native-NCHW) path


def _composite_kernel(bg_ref, img_ref, out_ref):
    # img_ref block: (1, 4, T, L); out_ref block: (1, 3, T, L); bg_ref: (3,) f32 in SMEM.
    alpha = img_ref[0, 3].astype(jnp.float32)          # (T, L), loaded once per tile
    one_minus_alpha = 1.0 - alpha
    for c in range(3):                                  # static unroll over RGB
        bg_c = bg_ref[c]                                # scalar read from SMEM
        rgb = img_ref[0, c].astype(jnp.float32)
        out_ref[0, c] = (rgb * alpha + one_minus_alpha * bg_c).astype(out_ref.dtype)


def _round_up(x: int, m: int) -> int:
    return ((x + m - 1) // m) * m


def _cdiv(a: int, b: int) -> int:
    return -(-a // b)


def _choose_row_tile(rows: int, batch: int, *, max_rows: int, min_rows: int) -> int:
    """Row-tile size: multiple of 8 (or the full extent), in [min_rows, max_rows],
    splitting the row axis enough to reach ~_TARGET_STEPS total grid steps."""
    splits = _cdiv(_TARGET_STEPS, max(batch, 1))
    t = _round_up(_cdiv(rows, splits), 8)
    t = max(min(t, max_rows), min_rows)   # min/max_rows are multiples of 8
    return rows if t >= rows else t


def _normalize_background(background) -> jax.Array:
    bg = jnp.asarray(background, dtype=jnp.float32)
    if bg.ndim == 0:                       # python / numpy scalar
        bg = jnp.full((3,), bg, dtype=jnp.float32)
    return bg.reshape(3)


def _pallas_composite(bg: jax.Array, x: jax.Array, row_tile: int,
                      cost: pl.CostEstimate) -> jax.Array:
    """x: (B, 4, R, L) -> (B, 3, R, L); tiles are (1, 4, row_tile, L) / (1, 3, row_tile, L)."""
    B, _, R, L = x.shape
    grid = (B, pl.cdiv(R, row_tile))
    return pl.pallas_call(
        _composite_kernel,
        out_shape=jax.ShapeDtypeStruct((B, 3, R, L), x.dtype),
        grid_spec=pltpu.PrefetchScalarGridSpec(
            num_scalar_prefetch=0,
            grid=grid,
            in_specs=[
                pl.BlockSpec(memory_space=pltpu.MemorySpace.SMEM),              # background (3,)
                pl.BlockSpec((1, 4, row_tile, L), lambda b, s: (b, 0, s, 0)),   # RGBA tile
            ],
            out_specs=pl.BlockSpec((1, 3, row_tile, L), lambda b, s: (b, 0, s, 0)),
        ),
        compiler_params=pltpu.CompilerParams(
            dimension_semantics=("parallel", "parallel"),
        ),
        cost_estimate=cost,
    )(bg, x)


def composite_alpha(img: jax.Array, background) -> jax.Array:
    """Composite an NCHW RGBA image onto a solid background.

    img: (B, 4, H, W) or (B, 3, H, W).  background: scalar or 3-vector.
    """
    if img.shape[-3] == 3:
        return img                         # already RGB -> module returns input untouched
    assert img.shape[-3] == 4, "expected RGBA input with 4 channels at dim -3"
    assert img.ndim == 4, "expected NCHW input"

    bg = _normalize_background(background)

    B, C, H, W = img.shape
    hw = H * W
    itemsize = jnp.dtype(img.dtype).itemsize
    cost = pl.CostEstimate(
        flops=3 * 3 * B * hw,              # mul + mul + add per RGB element
        transcendentals=0,
        bytes_accessed=(4 + 3) * B * hw * itemsize,
    )

    if hw % _LANES == 0:
        # Fast path: lane-dense layout; the reshape of contiguous trailing dims is free.
        S = hw // _LANES
        x = img.reshape(B, C, S, _LANES)
        ts = _choose_row_tile(S, B, max_rows=_MAX_TS, min_rows=_MIN_TS)
        out = _pallas_composite(bg, x, ts, cost)
        return out.reshape(B, 3, H, W)

    # Misaligned path: native NCHW, W as full lane dim, tile over H.  No pad/slice HBM passes.
    row_bytes = 4 * W * itemsize
    max_rows = max(8, ((_MAX_TILE_BYTES // row_bytes) // 8) * 8)
    th = _choose_row_tile(H, B, max_rows=max_rows, min_rows=8)
    return _pallas_composite(bg, img, th, cost)


def _reference(img, background):
    bg = _normalize_background(background)[:, None, None]     # (3, 1, 1)
    if img.shape[-3] == 3:
        return img
    alpha = img[..., 3:4, :, :].astype(jnp.float32)
    rgb = img[..., :3, :, :].astype(jnp.float32)
    return (rgb * alpha + (1.0 - alpha) * bg).astype(img.dtype)


if __name__ == "__main__":
    key = jax.random.PRNGKey(0)
    B, C, H, W = 2, 4, 16, 16
    img = jax.random.uniform(key, (B, C, H, W), dtype=jnp.float32)
    background = (0.25, 0.5, 0.75)

    out = jax.block_until_ready(composite_alpha(img, background))
    ref = _reference(img, background)
    assert out.shape == (B, 3, H, W)
    assert jnp.allclose(out, ref, atol=1e-6, rtol=1e-6), "mismatch vs reference (aligned path)"

    # Lane-misaligned spatial size: exercises the native-NCHW path (partial row block, masked
    # stores at the bottom edge) and a scalar background.
    img_odd = jax.random.uniform(jax.random.PRNGKey(1), (1, 4, 10, 12), dtype=jnp.float32)
    out_odd = jax.block_until_ready(composite_alpha(img_odd, 0.5))
    ref_odd = _reference(img_odd, 0.5)
    assert out_odd.shape == (1, 3, 10, 12)
    assert jnp.allclose(out_odd, ref_odd, atol=1e-6, rtol=1e-6), "mismatch (misaligned path)"

    # 3-channel passthrough branch.
    img3 = img[:, :3, :, :]
    out3 = jax.block_until_ready(composite_alpha(img3, background))
    assert jnp.array_equal(out3, img3)

    print("KERNEL_OK")
</pallas_src>

<mosaic_0001>
module attributes {stable_mosaic.version = 11 : i64} {
  func.func @_composite_kernel(%arg0: i32, %arg1: i32, %arg2: memref<3xf32, #tpu.memory_space<smem>>, %arg3: memref<1x4x2x128xf32, #tpu.memory_space<vmem>>, %arg4: memref<1x3x2x128xf32, #tpu.memory_space<vmem>>) attributes {dimension_semantics = [#tpu.dimension_semantics<parallel>, #tpu.dimension_semantics<parallel>], iteration_bounds = array<i64: 2, 1>, scalar_prefetch = 0 : i64, scratch_operands = 0 : i64, tpu.core_type = #tpu.core_type<tc>, window_params = [{transform_indices = @transform_0, window_bounds = array<i64: 3>}, {transform_indices = @transform_1, window_bounds = array<i64: 1, 4, 2, 128>}, {transform_indices = @transform_2, window_bounds = array<i64: 1, 3, 2, 128>}]} {
    %c0 = arith.constant 0 : index
    %c3 = arith.constant 3 : index
    %c0_0 = arith.constant 0 : index
    %c0_1 = arith.constant 0 : index
    %0 = vector.load %arg3[%c0, %c3, %c0_0, %c0_1] : memref<1x4x2x128xf32, #tpu.memory_space<vmem>>, vector<1x1x2x128xf32>
    %1 = vector.shape_cast %0 : vector<1x1x2x128xf32> to vector<2x128xf32>
    %cst = arith.constant 1.000000e+00 : f32
    %2 = vector.broadcast %cst : f32 to vector<2x128xf32>
    %3 = arith.subf %2, %1 : vector<2x128xf32>
    %c0_2 = arith.constant 0 : index
    %4 = memref.load %arg2[%c0_2] : memref<3xf32, #tpu.memory_space<smem>>
    %c0_3 = arith.constant 0 : index
    %c0_4 = arith.constant 0 : index
    %c0_5 = arith.constant 0 : index
    %c0_6 = arith.constant 0 : index
    %5 = vector.load %arg3[%c0_3, %c0_4, %c0_5, %c0_6] : memref<1x4x2x128xf32, #tpu.memory_space<vmem>>, vector<1x1x2x128xf32>
    %6 = vector.shape_cast %5 : vector<1x1x2x128xf32> to vector<2x128xf32>
    %7 = arith.mulf %6, %1 : vector<2x128xf32>
    %8 = vector.broadcast %4 : f32 to vector<2x128xf32>
    %9 = arith.mulf %3, %8 : vector<2x128xf32>
    %10 = arith.addf %7, %9 : vector<2x128xf32>
    %c0_7 = arith.constant 0 : index
    %c0_8 = arith.constant 0 : index
    %c0_9 = arith.constant 0 : index
    %c0_10 = arith.constant 0 : index
    %11 = vector.load %arg4[%c0_7, %c0_8, %c0_9, %c0_10] : memref<1x3x2x128xf32, #tpu.memory_space<vmem>>, vector<1x1x2x128xf32>
    %12 = vector.shape_cast %11 : vector<1x1x2x128xf32> to vector<2x128xf32>
    %13 = vector.shape_cast %10 : vector<2x128xf32> to vector<1x1x2x128xf32>
    tpu.vector_store %arg4[%c0_7, %c0_8, %c0_9, %c0_10], %13 {strides = array<i32>} : memref<1x3x2x128xf32, #tpu.memory_space<vmem>>, vector<1x1x2x128xf32>,
    %c1 = arith.constant 1 : index
    %14 = memref.load %arg2[%c1] : memref<3xf32, #tpu.memory_space<smem>>
    %c0_11 = arith.constant 0 : index
    %c1_12 = arith.constant 1 : index
    %c0_13 = arith.constant 0 : index
    %c0_14 = arith.constant 0 : index
    %15 = vector.load %arg3[%c0_11, %c1_12, %c0_13, %c0_14] : memref<1x4x2x128xf32, #tpu.memory_space<vmem>>, vector<1x1x2x128xf32>
    %16 = vector.shape_cast %15 : vector<1x1x2x128xf32> to vector<2x128xf32>
    %17 = arith.mulf %16, %1 : vector<2x128xf32>
    %18 = vector.broadcast %14 : f32 to vector<2x128xf32>
    %19 = arith.mulf %3, %18 : vector<2x128xf32>
    %20 = arith.addf %17, %19 : vector<2x128xf32>
    %c0_15 = arith.constant 0 : index
    %c1_16 = arith.constant 1 : index
    %c0_17 = arith.constant 0 : index
    %c0_18 = arith.constant 0 : index
    %21 = vector.load %arg4[%c0_15, %c1_16, %c0_17, %c0_18] : memref<1x3x2x128xf32, #tpu.memory_space<vmem>>, vector<1x1x2x128xf32>
    %22 = vector.shape_cast %21 : vector<1x1x2x128xf32> to vector<2x128xf32>
    %23 = vector.shape_cast %20 : vector<2x128xf32> to vector<1x1x2x128xf32>
    tpu.vector_store %arg4[%c0_15, %c1_16, %c0_17, %c0_18], %23 {strides = array<i32>} : memref<1x3x2x128xf32, #tpu.memory_space<vmem>>, vector<1x1x2x128xf32>,
    %c2 = arith.constant 2 : index
    %24 = memref.load %arg2[%c2] : memref<3xf32, #tpu.memory_space<smem>>
    %c0_19 = arith.constant 0 : index
    %c2_20 = arith.constant 2 : index
    %c0_21 = arith.constant 0 : index
    %c0_22 = arith.constant 0 : index
    %25 = vector.load %arg3[%c0_19, %c2_20, %c0_21, %c0_22] : memref<1x4x2x128xf32, #tpu.memory_space<vmem>>, vector<1x1x2x128xf32>
    %26 = vector.shape_cast %25 : vector<1x1x2x128xf32> to vector<2x128xf32>
    %27 = arith.mulf %26, %1 : vector<2x128xf32>
    %28 = vector.broadcast %24 : f32 to vector<2x128xf32>
    %29 = arith.mulf %3, %28 : vector<2x128xf32>
    %30 = arith.addf %27, %29 : vector<2x128xf32>
    %c0_23 = arith.constant 0 : index
    %c2_24 = arith.constant 2 : index
    %c0_25 = arith.constant 0 : index
    %c0_26 = arith.constant 0 : index
    %31 = vector.load %arg4[%c0_23, %c2_24, %c0_25, %c0_26] : memref<1x3x2x128xf32, #tpu.memory_space<vmem>>, vector<1x1x2x128xf32>
    %32 = vector.shape_cast %31 : vector<1x1x2x128xf32> to vector<2x128xf32>
    %33 = vector.shape_cast %30 : vector<2x128xf32> to vector<1x1x2x128xf32>
    tpu.vector_store %arg4[%c0_23, %c2_24, %c0_25, %c0_26], %33 {strides = array<i32>} : memref<1x3x2x128xf32, #tpu.memory_space<vmem>>, vector<1x1x2x128xf32>,
    return
  }
  func.func @transform_0(%arg0: i32, %arg1: i32) -> i32 {
    %c0_i32 = arith.constant 0 : i32
    %c0_i32_0 = arith.constant 0 : i32
    return %c0_i32 : i32
  }
  func.func @transform_1(%arg0: i32, %arg1: i32) -> (i32, i32, i32, i32) {
    %c0_i32 = arith.constant 0 : i32
    %c0_i32_0 = arith.constant 0 : i32
    %c0_i32_1 = arith.constant 0 : i32
    return %arg0, %c0_i32, %arg1, %c0_i32_0 : i32, i32, i32, i32
  }
  func.func @transform_2(%arg0: i32, %arg1: i32) -> (i32, i32, i32, i32) {
    %c0_i32 = arith.constant 0 : i32
    %c0_i32_0 = arith.constant 0 : i32
    %c0_i32_1 = arith.constant 0 : i32
    return %arg0, %c0_i32, %arg1, %c0_i32_0 : i32, i32, i32, i32
  }
}

</mosaic_0001>

<llo_original>
// kernel: tpu_custom_call.1
$region0: #{tpu_custom_call.1}
  #allocation0 [shape = 'u32[]', space=smem, size = 0x4, offset = 0x4, fixed_abs, tag = 'smem constant byte address 0x4 - core index']
  #allocation1 [shape = 'u32[144,128]{1,0:T(1,128)}', space=vmem, size = 0x12000, scoped, tag = 'internal scratch']
  %s0 = inlined_call_operand.hbm [shape: f32[3], index: 0, kind: input, shape index: {}]
  %s1 = inlined_call_operand.hbm [shape: f32[2,4,2,128], index: 1, kind: input, shape index: {}]
  %s2 = inlined_call_operand.hbm [shape: f32[2,3,2,128], index: 2, kind: output, shape index: {}]
  %s3 = sld [smem:[#allocation0]]
  $region49: #{tpu_custom_call.1} parent=0
    _
  %s5 = ssub.s32 1, %s3
  %s6 = scalar_select 0, %s5, %s3
  $region1: #{tpu_custom_call.1} parent=0
    #allocation2 [shape = 'u8[512]{0}', space=smem, size = 0x200, scoped, tag = 'input window, operand 0, single buffered']
    #allocation3 [shape = 's32[2]{0}', space=sflag, size = 0x8, scoped, tag = 'scoped memory for tpu_custom_call.1']
    #allocation4 [shape = 's32[2]{0}', space=sflag, size = 0x8, scoped, tag = 'scoped memory for tpu_custom_call.1']
    #allocation5 [shape = 's32[2]{0}', space=sflag, size = 0x8, scoped, tag = 'scoped memory for tpu_custom_call.1']
    #allocation6 [shape = 'u8[8192]{0}', space=vmem, size = 0x2000, scoped, tag = 'input window, operand 1']
    #allocation7 [shape = 'u8[6144]{0}', space=vmem, size = 0x1800, scoped, tag = 'output window, operand 0']
    %7 = vsyncpa [#allocation5], 0
    %8 = vsyncpa [#allocation3], 0
    %s9 = scalar_lea.sflag [#allocation3], 1
    %10 = vsyncpa %s9, 0
    %11 = vsyncpa [#allocation4], 0
    %s12 = scalar_lea.sflag [#allocation4], 1
    %13 = vsyncpa %s12, 0
    loop: start=0, step=1, limit=4
    $region2: #{tpu_custom_call.1} parent=1 // loop_pre_header
      _
    $region3: #{tpu_custom_call.1} parent=1 // loop_header
      %s15 = sphi 0, %s19
      %p16 = scmp.ge.s32.totalorder %s15, 4
      %s22 = sphi 0, %s34
      %s23 = sphi 0, %s30
      %s24 = sphi 0, %s22
      %s25 = sphi 0, %s23
      %s26 = sphi 0, %s24
      %s27 = sphi 0, %s25
      %s35 = sphi 0, %s35
      %s37 = sphi 0, %s35
      %s38 = sphi 0, %s37
      %s52 = sphi 0, %s38
      %s60 = sphi 0, %s62
      %s63 = sphi 0, %s60
      %s64 = sphi 0, %s63
      %s80 = sphi 0, %s64
      %s88 = sphi 0, %s90
      %s91 = sphi 0, %s88
      %s92 = sphi 0, %s91
      %s108 = sphi 0, %s92
    $region4: #{tpu_custom_call.1} parent=1 // loop_header_branch
      %18 = sbr.rel (%p16) target = $region8
    $region5: #{tpu_custom_call.1} parent=1 // loop_body
      %s20 = ssub.s32 %s15, 1
      %s21 = ssub.s32 %s15, 2
      %s28 = sadd.s32 1, %s23
      %p29 = scmp.ge.s32.totalorder %s28, 1
      %s30 = scalar_select %p29, 0, %s28
      %s31 = sadd.s32 1, %s22
      %s32 = scalar_select %p29, %s31, %s22
      %p33 = scmp.ge.s32.totalorder %s32, 2
      %s34 = scalar_select %p33, 0, %s32
      %s36 = sadd.s32 %s35, 1
      %p39 = scmp.eq.s32.totalorder %s15, 1
      %p40 = scmp.ne.s32.totalorder %s35, %s37
      %p41 = scmp.eq.s32.totalorder %s15, 0
      %p42 = por %p40, %p41
      %p43 = scmp.ne.s32.totalorder %s35, %s37
      %p44 = scmp.eq.s32.totalorder %s20, 1
      %p45 = por %p43, %p44
      %p46 = scmp.ne.s32.totalorder %s37, %s38
      %p47 = scmp.eq.s32.totalorder %s20, 0
      %p48 = por %p46, %p47
      %p49 = scmp.ne.s32.totalorder %s37, %s38
      %p50 = scmp.eq.s32.totalorder %s21, 1
      %p51 = por %p49, %p50
      %p53 = scmp.ne.s32.totalorder %s38, %s52
      %p54 = scmp.eq.s32.totalorder %s21, 0
      %p55 = por %p53, %p54
      %s56 = ssub.s32 %s22, %s34
      %s57 = ssub.s32 %s23, %s30
      %s58 = sor.u32 %s56, %s57
      %p59 = scmp.eq.s32.totalorder %s58, 0
      %s61 = sadd.s32 %s60, 1
      %s62 = scalar_select %p59, %s60, %s61
      %p65 = pneg %p59
      %p66 = scmp.eq.s32.totalorder %s15, 1
      %p67 = por %p65, %p66
      %p68 = scmp.ne.s32.totalorder %s60, %s63
      %p69 = scmp.eq.s32.totalorder %s15, 0
      %p70 = por %p68, %p69
      %p71 = scmp.ne.s32.totalorder %s60, %s63
      %p72 = scmp.eq.s32.totalorder %s20, 1
      %p73 = por %p71, %p72
      %p74 = scmp.ne.s32.totalorder %s63, %s64
      %p75 = scmp.eq.s32.totalorder %s20, 0
      %p76 = por %p74, %p75
      %p77 = scmp.ne.s32.totalorder %s63, %s64
      %p78 = scmp.eq.s32.totalorder %s21, 1
      %p79 = por %p77, %p78
      %p81 = scmp.ne.s32.totalorder %s64, %s80
      %p82 = scmp.eq.s32.totalorder %s21, 0
      %p83 = por %p81, %p82
      %s84 = ssub.s32 %s22, %s34
      %s85 = ssub.s32 %s23, %s30
      %s86 = sor.u32 %s84, %s85
      %p87 = scmp.eq.s32.totalorder %s86, 0
      %s89 = sadd.s32 %s88, 1
      %s90 = scalar_select %p87, %s88, %s89
      %p93 = pneg %p87
      %p94 = scmp.eq.s32.totalorder %s15, 1
      %p95 = por %p93, %p94
      %p96 = scmp.ne.s32.totalorder %s88, %s91
      %p97 = scmp.eq.s32.totalorder %s15, 0
      %p98 = por %p96, %p97
      %p99 = scmp.ne.s32.totalorder %s88, %s91
      %p100 = scmp.eq.s32.totalorder %s20, 1
      %p101 = por %p99, %p100
      %p102 = scmp.ne.s32.totalorder %s91, %s92
      %p103 = scmp.eq.s32.totalorder %s20, 0
      %p104 = por %p102, %p103
      %p105 = scmp.ne.s32.totalorder %s91, %s92
      %p106 = scmp.eq.s32.totalorder %s21, 1
      %p107 = por %p105, %p106
      %p109 = scmp.ne.s32.totalorder %s92, %s108
      %p110 = scmp.eq.s32.totalorder %s21, 0
      %p111 = por %p109, %p110
      %p112 = scmp.le.s32.totalorder 1, %s15
      %p113 = scmp.lt.s32.totalorder %s15, 3
      %p114 = pnand %p112, %p113
      %p115 = pneg %p114
      // Predicated region
      $region9: #{tpu_custom_call.1} parent=5 // pred_check
        _
      $region10: #{tpu_custom_call.1} parent=5 // pred_check_branch
        %117 = sbr.rel (%p114) target = $region12
      $region11: #{tpu_custom_call.1} parent=5 // pred_region
        %s118 = ssub.s32 %s15, 1
        // Predicated region
        $region13: #{tpu_custom_call.1} parent=11 // pred_check
          %p119 = pneg %p48
        $region14: #{tpu_custom_call.1} parent=11 // pred_check_branch
          %121 = sbr.rel (%p119) target = $region16
        $region15: #{tpu_custom_call.1} parent=11 // pred_region
          %s123 = ssub.s32 16, 16
          %124 = vsyncadd [#allocation5], %s123
          %127 = dma.hbm_to_smem %s0, 16, [#allocation2], [#allocation5]
        $region16: #{tpu_custom_call.1} parent=11 // pred_fallthru
          _
      $region12: #{tpu_custom_call.1} parent=5 // pred_fallthru
        _
      %p128 = scmp.lt.s32.totalorder %s15, 2
      // Predicated region
      $region17: #{tpu_custom_call.1} parent=5 // pred_check
        %p129 = pneg %p128
      $region18: #{tpu_custom_call.1} parent=5 // pred_check_branch
        %131 = sbr.rel (%p129) target = $region20
      $region19: #{tpu_custom_call.1} parent=5 // pred_region
        // Predicated region
        $region21: #{tpu_custom_call.1} parent=19 // pred_check
          %p132 = pneg %p70
        $region22: #{tpu_custom_call.1} parent=19 // pred_check_branch
          %134 = sbr.rel (%p132) target = $region24
        $region23: #{tpu_custom_call.1} parent=19 // pred_region
          %s135 = sand.u32 %s60, 1
          %s136 = scalar_lea.sflag [#allocation3], %s135
          %s137 = sand.u32 %s60, 1
          %s138 = smul.addr %s137, 8
          %s139 = scalar_lea.vmem [#allocation6], %s138
          %s141 = ssub.s32 128, 128
          %142 = vsyncadd %s136, %s141
          %s143 = smul.addr %s22, 4
          %s144 = sadd.s32 %s23, %s143
          %s145 = smul.addr %s144, 32
          %s146 = scalar_lea.hbm %s1, %s145
          %s147 = sshll.u32 %s139, 4
          %s148 = int_to_ptr.vmem [resolvable:$true] %s147
          %153 = dma.hbm_to_vmem [thread:$0]  %s146, 128, %s148, %s136, 32, 32, 2
        $region24: #{tpu_custom_call.1} parent=19 // pred_fallthru
          _
      $region20: #{tpu_custom_call.1} parent=5 // pred_fallthru
        _
      %p154 = scmp.le.s32.totalorder 1, %s15
      %p155 = scmp.lt.s32.totalorder %s15, 3
      %p156 = pnand %p154, %p155
      %p157 = pneg %p156
      // Predicated region
      $region25: #{tpu_custom_call.1} parent=5 // pred_check
        _
      $region26: #{tpu_custom_call.1} parent=5 // pred_check_branch
        %159 = sbr.rel (%p156) target = $region28
      $region27: #{tpu_custom_call.1} parent=5 // pred_region
        %s160 = ssub.s32 %s15, 1
        // Predicated region
        $region29: #{tpu_custom_call.1} parent=27 // pred_check
          %p161 = pneg %p48
        $region30: #{tpu_custom_call.1} parent=27 // pred_check_branch
          %163 = sbr.rel (%p161) target = $region32
        $region31: #{tpu_custom_call.1} parent=27 // pred_region
          %164 = dma.done [#allocation5], 16
        $region32: #{tpu_custom_call.1} parent=27 // pred_fallthru
          _
        %s165 = sand.u32 %s63, 1
        %s166 = scalar_lea.sflag [#allocation3], %s165
        %s167 = sand.u32 %s63, 1
        %s168 = smul.addr %s167, 8
        %s169 = scalar_lea.vmem [#allocation6], %s168
        // Predicated region
        $region33: #{tpu_custom_call.1} parent=27 // pred_check
          %p170 = pneg %p76
        $region34: #{tpu_custom_call.1} parent=27 // pred_check_branch
          %172 = sbr.rel (%p170) target = $region36
        $region35: #{tpu_custom_call.1} parent=27 // pred_region
          %173 = dma.done %s166, 128
        $region36: #{tpu_custom_call.1} parent=27 // pred_fallthru
          _
        %174 = sfence
        %p175 = pneg %p48
        %p176 = pneg %p45
        %s177 = sand.u32 %s63, 1
        %s178 = scalar_lea.sflag [#allocation3], %s177
        %s179 = sand.u32 %s63, 1
        %s180 = smul.addr %s179, 8
        %s181 = scalar_lea.vmem [#allocation6], %s180
        %p182 = pneg %p76
        %p183 = pneg %p73
        %p184 = pneg %p104
        %p185 = pneg %p101
        %s186 = sand.u32 %s91, 1
        %s187 = scalar_lea.sflag [#allocation4], %s186
        %s188 = sand.u32 %s91, 1
        %s189 = smul.addr %s188, 6
        %s190 = scalar_lea.vmem [#allocation7], %s189
        %s191 = scalar_lea.vmem %s169, 6 [#allocation6]
        %v192 = vld [vmem:[%s191] sm:$0x3]
        %v193 = vsub.f32 1.0, %v192
        %s194 = sld [smem:[#allocation2]]
        %v195 = vld [vmem:[%s169] sm:$0x3]
        %v196 = vmul.f32 %v195, %v192
        %v197 = vstv %s194
        %v198 = vmul.f32 %v193, %v197
        %v199 = vadd.f32 %v196, %v198
        %200 = vst [vmem:[%s190] sm:$0x3] %v199
        %s201 = sld [smem:[#allocation2 + $0x1]]
        %s202 = scalar_lea.vmem %s169, 2 [#allocation6]
        %v203 = vld [vmem:[%s202] sm:$0x3]
        %v204 = vmul.f32 %v203, %v192
        %v205 = vstv %s201
        %v206 = vmul.f32 %v193, %v205
        %v207 = vadd.f32 %v204, %v206
        %s208 = scalar_lea.vmem %s190, 2 [#allocation7]
        %209 = vst [vmem:[%s208] sm:$0x3] %v207
        %s210 = sld [smem:[#allocation2 + $0x2]]
        %s211 = scalar_lea.vmem %s169, 4 [#allocation6]
        %v212 = vld [vmem:[%s211] sm:$0x3]
        %v213 = vmul.f32 %v212, %v192
        %v214 = vstv %s210
        %v215 = vmul.f32 %v193, %v214
        %v216 = vadd.f32 %v213, %v215
        %s217 = scalar_lea.vmem %s190, 4 [#allocation7]
        %218 = vst [vmem:[%s217] sm:$0x3] %v216
        %s219 = sand.u32 %s91, 1
        %s220 = scalar_lea.sflag [#allocation4], %s219
        %s221 = sand.u32 %s91, 1
        %s222 = smul.addr %s221, 6
        %s223 = scalar_lea.vmem [#allocation7], %s222
        // Predicated region
        $region37: #{tpu_custom_call.1} parent=27 // pred_check
          %p224 = pneg %p101
        $region38: #{tpu_custom_call.1} parent=27 // pred_check_branch
          %226 = sbr.rel (%p224) target = $region40
        $region39: #{tpu_custom_call.1} parent=27 // pred_region
          %s228 = ssub.s32 96, 96
          %229 = vsyncadd %s220, %s228
          %s230 = smul.addr %s24, 3
          %s231 = sadd.s32 %s25, %s230
          %s232 = smul.addr %s231, 32
          %s233 = scalar_lea.hbm %s2, %s232
          %s234 = sshll.u32 %s223, 4
          %s235 = int_to_ptr.vmem [resolvable:$true] %s234
          %240 = dma.vmem_to_hbm [thread:$0]  %s235, 96, %s233, %s220, 32, 32, 2
        $region40: #{tpu_custom_call.1} parent=27 // pred_fallthru
          _
      $region28: #{tpu_custom_call.1} parent=5 // pred_fallthru
        _
      %p241 = scmp.le.s32.totalorder 2, %s15
      // Predicated region
      $region41: #{tpu_custom_call.1} parent=5 // pred_check
        %p242 = pneg %p241
      $region42: #{tpu_custom_call.1} parent=5 // pred_check_branch
        %244 = sbr.rel (%p242) target = $region44
      $region43: #{tpu_custom_call.1} parent=5 // pred_region
        %s245 = ssub.s32 %s15, 2
        // Predicated region
        $region45: #{tpu_custom_call.1} parent=43 // pred_check
          %p246 = pneg %p107
        $region46: #{tpu_custom_call.1} parent=43 // pred_check_branch
          %248 = sbr.rel (%p246) target = $region48
        $region47: #{tpu_custom_call.1} parent=43 // pred_region
          %s249 = sand.u32 %s92, 1
          %s250 = scalar_lea.sflag [#allocation4], %s249
          %s251 = sand.u32 %s92, 1
          %s252 = smul.addr %s251, 6
          %s253 = scalar_lea.vmem [#allocation7], %s252
          %254 = dma.done %s250, 96
        $region48: #{tpu_custom_call.1} parent=43 // pred_fallthru
          _
      $region44: #{tpu_custom_call.1} parent=5 // pred_fallthru
        _
    $region6: #{tpu_custom_call.1} parent=1 // loop_footer
      %s19 = sadd.s32 1, %s15
    $region7: #{tpu_custom_call.1} parent=1 // loop_footer_branch
      %14 = sbr.rel target = $region3
    $region8: #{tpu_custom_call.1} parent=1 // loop_exit
      _
    %255 = vsyncpa [#allocation3], 1
    %s256 = scalar_lea.sflag [#allocation3], 1
    %257 = vsyncpa %s256, 1
    %258 = vsyncpa [#allocation4], 1
    %s259 = scalar_lea.sflag [#allocation4], 1
    %260 = vsyncpa %s259, 1
    %261 = vsyncpa [#allocation5], 1
    %s262 = scalar_lea.sflag [#allocation5], 1
    %263 = vsyncpa %s262, 1

</llo_original>
